<compile_context>
chip_gen: v6e
topology: v6e:2x2x1
jax: 0.10.0
libtpu: 0.0.40
codegen_flags: <defaults>
</compile_context>

<pallas_src>
import functools
import math

import jax
import jax.numpy as jnp
import numpy as np
from jax.experimental import pallas as pl
from jax.experimental.pallas import tpu as pltpu


_MIN_SPLIT_BYTES = 8 * 1024 * 1024   # above this per-step footprint, force the
                                     # grid to >= 2 steps (v7x has 2 TCs/chip).


def _round_up(x, m):
    return ((x + m - 1) // m) * m


def _sublane_multiple(dtype):
    """Minimum sublane multiple for packed dtypes (f32: 8, bf16: 16, int8/fp8: 32)."""
    return max(8, 32 // jnp.dtype(dtype).itemsize)


def _elem_footprint_bytes(dtype):
    """Per-element VMEM footprint of one pipeline step: double-buffered input +
    double-buffered output (input dtype) plus ~3 f32 temporaries the kernel
    materializes (upcast x / x_exp / pre-cast result)."""
    itemsize = jnp.dtype(dtype).itemsize
    return 4 * itemsize + 12


@functools.lru_cache(maxsize=None)
def _vmem_budgets():
    """(scoped vmem_limit_bytes, per-pipeline-step byte budget), derived from
    the actual chip generation instead of hard-coded constants."""
    vmem_cap = None
    try:
        info = pltpu.get_tpu_info()
        vmem_cap = getattr(info, "vmem_capacity_bytes", None)
    except Exception:
        vmem_cap = None
    if not vmem_cap:
        vmem_cap = 64 * 1024 * 1024            # conservative (v7x per-core VMEM)
    vmem_limit = int(min(max(32 * 1024 * 1024, vmem_cap * 0.65),
                         64 * 1024 * 1024))
    step_budget = int(min(24 * 1024 * 1024, vmem_limit // 2))
    return vmem_limit, step_budget


def _choose_tile(total, align, elems_per_unit, foot_bytes, budget_bytes,
                 *, min_two_steps=False):
    """Largest align-multiple tile along an axis of `total` units such that the
    whole pipeline-step footprint (elems_per_unit elements per unit of this
    axis, foot_bytes per element) stays within budget_bytes.  Optionally force
    >= 2 (and prefer an even number of) grid steps for v7x megacore."""
    if total <= align:
        return total
    unit_bytes = max(1, elems_per_unit * foot_bytes)
    tile = max(align, (budget_bytes // unit_bytes // align) * align)
    if tile >= total:
        tile = total
        if min_two_steps and total * unit_bytes > _MIN_SPLIT_BYTES:
            tile = min(total, _round_up(pl.cdiv(total, 2), align))
    steps = pl.cdiv(total, tile)
    if steps > 1 and steps % 2 == 1:           # prefer even step counts (2 TCs)
        alt = _round_up(pl.cdiv(total, steps + 1), align)
        if pl.cdiv(total, alt) % 2 == 0:
            tile = alt
    return tile


def _recip(d):
    # Approx reciprocal runs on the EUP slot (free w.r.t. VALU); one Newton
    # step restores ~f32 accuracy.  `d` is the (small) reduced-sum tensor; the
    # broadcast happens in the cheap elementwise multiply afterwards.
    inv = pl.reciprocal(d, approx=True)
    return inv * (2.0 - d * inv)


def _to_f32(x):
    return x if x.dtype == jnp.float32 else x.astype(jnp.float32)


# --------------------------------------------------------------------------
# Kernels
# --------------------------------------------------------------------------

def _zs_last_kernel(x_ref, o_ref, *, eps):
    """Block (TM, N); reduce over the lane axis (-1)."""
    x = _to_f32(x_ref[...])
    e = jnp.exp(x) - 1.0          # faithful to torch.exp(x) - 1 (single exp issue)
    x_exp = e * e
    d = jnp.sum(x_exp, axis=-1, keepdims=True) + eps
    o_ref[...] = (x_exp * _recip(d)).astype(o_ref.dtype)


def _zs_packed_last_kernel(x_ref, o_ref, *, n, eps):
    """Small trailing reduce dim (n < 128, n | 128): block (TM, 128) where each
    row packs 128//n independent length-n groups (lane-dense loads and
    unmasked stores).  Per-group sums are broadcast to every lane of their
    group with one (TM,128)x(128,128) MXU matmul against a block-diagonal ones
    matrix — MXU is otherwise idle; HIGHEST precision keeps the sum at ~f32."""
    x = _to_f32(x_ref[...])
    e = jnp.exp(x) - 1.0
    x_exp = e * e
    lanes = x.shape[-1]
    log2n = n.bit_length() - 1     # n divides 128 -> power of two
    ri = jax.lax.broadcasted_iota(jnp.int32, (lanes, lanes), 0) >> log2n
    ci = jax.lax.broadcasted_iota(jnp.int32, (lanes, lanes), 1) >> log2n
    seg = (ri == ci).astype(jnp.float32)
    d = jnp.dot(x_exp, seg, preferred_element_type=jnp.float32,
                precision=jax.lax.Precision.HIGHEST) + eps
    o_ref[...] = (x_exp * _recip(d)).astype(o_ref.dtype)


def _zs_mid_kernel(x_ref, o_ref, *, eps):
    """Block (TP, K, TS); reduce over the middle (sublane) axis; lanes keep the
    array's original trailing axes (lane-dense)."""
    x = _to_f32(x_ref[...])
    e = jnp.exp(x) - 1.0
    x_exp = e * e
    d = jnp.sum(x_exp, axis=1, keepdims=True) + eps
    o_ref[...] = (x_exp * _recip(d)).astype(o_ref.dtype)


def _zs_small_k_kernel(x_ref, o_ref, *, k, s, eps):
    """Small reduction extent (k < sublane multiple): block (TP, k*s) with the
    k groups laid out as contiguous, 128-aligned, s-wide lane segments.
    Reduce with k-1 static lane-slice adds (no sublane-padding waste), then
    scale each segment."""
    x = _to_f32(x_ref[...])
    e = jnp.exp(x) - 1.0
    x_exp = e * e
    d = x_exp[:, 0:s]
    for j in range(1, k):
        d = d + x_exp[:, j * s:(j + 1) * s]
    inv = _recip(d + eps)
    for j in range(k):
        o_ref[:, j * s:(j + 1) * s] = (
            x_exp[:, j * s:(j + 1) * s] * inv).astype(o_ref.dtype)


# --------------------------------------------------------------------------
# Wrappers
# --------------------------------------------------------------------------

def _pallas_2d(kernel, x2, tm, vmem_limit):
    """Launch a row-tiled 2-D kernel (blocks (tm, W), full lane width)."""
    M, W = x2.shape
    return pl.pallas_call(
        kernel,
        out_shape=jax.ShapeDtypeStruct((M, W), x2.dtype),
        grid_spec=pltpu.PrefetchScalarGridSpec(
            num_scalar_prefetch=0,
            grid=(pl.cdiv(M, tm),),
            in_specs=[pl.BlockSpec((tm, W), lambda i: (i, 0))],
            out_specs=pl.BlockSpec((tm, W), lambda i: (i, 0)),
        ),
        compiler_params=pltpu.CompilerParams(
            dimension_semantics=("parallel",),
            vmem_limit_bytes=vmem_limit,
        ),
    )(x2)


def _zero_softmax_xla(x, dim, eps):
    """Plain-XLA fallback (also used as the reference in the self-test)."""
    x_exp = jnp.square(jnp.exp(x) - 1.0)
    return x_exp / (jnp.sum(x_exp, axis=dim, keepdims=True) + eps)


def _zero_softmax_last(x2, eps):
    """x2: (M, N), reduce over axis -1 (original trailing dim)."""
    M, N = x2.shape
    dtype = x2.dtype
    foot = _elem_footprint_bytes(dtype)
    sub = _sublane_multiple(dtype)
    vmem_limit, budget = _vmem_budgets()

    # Lane-density fast path for small reduce dims (N in 1..64 dividing 128):
    # pack r = 128//N groups per 128-lane row -> unmasked loads/stores.
    if N < 128 and 128 % N == 0 and M % (128 // N) == 0:
        r = 128 // N
        mp = M // r
        tm = _choose_tile(mp, sub, 128, foot, budget, min_two_steps=True)
        out = _pallas_2d(
            functools.partial(_zs_packed_last_kernel, n=N, eps=eps),
            x2.reshape(mp, 128), tm, vmem_limit)
        return out.reshape(M, N)

    # Very long reduce axis: the minimum aligned block exceeds the per-step
    # budget -> degrade gracefully to XLA.
    # TODO(synk): reduction-tiled two-pass Pallas variant for this case.
    if sub * N * foot > budget:
        return _zero_softmax_xla(x2, -1, eps)

    tm = _choose_tile(M, sub, N, foot, budget, min_two_steps=True)
    return _pallas_2d(functools.partial(_zs_last_kernel, eps=eps),
                      x2, tm, vmem_limit)


def _zero_softmax_mid(x3, eps):
    """x3: (P, K, S), reduce over axis 1 (the original `dim`)."""
    P, K, S = x3.shape
    dtype = x3.dtype
    foot = _elem_footprint_bytes(dtype)
    sub = _sublane_multiple(dtype)
    vmem_limit, budget = _vmem_budgets()

    # Small-K fast path: a (tp, K, ts) block would pad K up to the sublane
    # multiple (4-16x VMEM / vreg / EUP waste for K = 2..4); keep it 2-D and
    # lane-dense instead and reduce with static 128-aligned lane slices.
    row_elems = K * S
    if (K < sub and S % 128 == 0
            and min(P, sub) * row_elems * foot <= budget):
        tp = _choose_tile(P, sub, row_elems, foot, budget, min_two_steps=True)
        out = _pallas_2d(
            functools.partial(_zs_small_k_kernel, k=K, s=S, eps=eps),
            x3.reshape(P, row_elems), tp, vmem_limit)
        return out.reshape(P, K, S)

    k_pad = _round_up(K, sub)     # VMEM/vregs hold the sublane-padded K
    # Very long reduce axis -> degrade gracefully to XLA.
    # TODO(synk): reduction-tiled two-pass Pallas variant for this case.
    if k_pad * 128 * foot > budget:
        return _zero_softmax_xla(x3, 1, eps)

    ts = _choose_tile(S, 128, k_pad, foot, budget)
    tp = _choose_tile(P, 1, k_pad * ts, foot, budget,
                      min_two_steps=(ts == S))
    grid = (pl.cdiv(P, tp), pl.cdiv(S, ts))
    return pl.pallas_call(
        functools.partial(_zs_mid_kernel, eps=eps),
        out_shape=jax.ShapeDtypeStruct((P, K, S), dtype),
        grid_spec=pltpu.PrefetchScalarGridSpec(
            num_scalar_prefetch=0,
            grid=grid,
            in_specs=[pl.BlockSpec((tp, K, ts), lambda p, s: (p, 0, s))],
            out_specs=pl.BlockSpec((tp, K, ts), lambda p, s: (p, 0, s)),
        ),
        compiler_params=pltpu.CompilerParams(
            dimension_semantics=("parallel", "parallel"),
            vmem_limit_bytes=vmem_limit,
        ),
    )(x3)


def zero_softmax(x, dim=0, eps=1e-5):
    """Pallas implementation of ZeroSoftmax.forward (matches PyTorch semantics)."""
    ndim = x.ndim
    dim = dim % ndim
    shape = x.shape
    if dim == ndim - 1:
        m = math.prod(shape[:-1])
        out = _zero_softmax_last(x.reshape(m, shape[-1]), eps)
    else:
        p = math.prod(shape[:dim])
        s = math.prod(shape[dim + 1:])
        out = _zero_softmax_mid(x.reshape(p, shape[dim], s), eps)
    return out.reshape(shape)


if __name__ == "__main__":
    key = jax.random.PRNGKey(0)
    x = jax.random.normal(key, (2, 4, 16, 16), dtype=jnp.float32)

    # Default PyTorch signature: dim=0 -> small-K lane-dense fast path
    # (K=2 groups of S=1024 128-aligned lanes, no sublane padding, no transpose).
    out0 = jax.block_until_ready(zero_softmax(x, dim=0))
    ref0 = _zero_softmax_xla(x, 0, 1e-5)
    assert out0.shape == x.shape and out0.dtype == x.dtype
    np.testing.assert_allclose(np.asarray(out0), np.asarray(ref0),
                               rtol=2e-5, atol=2e-6)

    # dim=1 -> small-K fast path with a leading prefix (P=2, K=4, S=256).
    out1 = jax.block_until_ready(zero_softmax(x, dim=1))
    ref1 = _zero_softmax_xla(x, 1, 1e-5)
    np.testing.assert_allclose(np.asarray(out1), np.asarray(ref1),
                               rtol=2e-5, atol=2e-6)

    # Middle-axis reduction with K >= sublane multiple -> 3-D sublane-reduce path.
    out_mid = jax.block_until_ready(zero_softmax(x, dim=2))
    ref_mid = _zero_softmax_xla(x, 2, 1e-5)
    np.testing.assert_allclose(np.asarray(out_mid), np.asarray(ref_mid),
                               rtol=2e-5, atol=2e-6)

    # Trailing-axis reduction with a small reduce dim (N=16 < 128): packed
    # lane-dense path, per-group sums via the block-diagonal MXU matmul.
    out_last = jax.block_until_ready(zero_softmax(x, dim=-1))
    ref_last = _zero_softmax_xla(x, -1, 1e-5)
    np.testing.assert_allclose(np.asarray(out_last), np.asarray(ref_last),
                               rtol=2e-5, atol=2e-6)

    # Larger case: generation-aware budget-sized tiles, >=2-step (even) grids
    # for v7x megacore and the ragged last tile (no jnp.pad / output slice).
    xb = jax.random.normal(jax.random.PRNGKey(1), (1000, 1024), dtype=jnp.float32)
    for d in (0, 1):
        outb = jax.block_until_ready(zero_softmax(xb, dim=d))
        refb = _zero_softmax_xla(xb, d, 1e-5)
        np.testing.assert_allclose(np.asarray(outb), np.asarray(refb),
                                   rtol=2e-5, atol=2e-6)

    print("KERNEL_OK")
</pallas_src>

<mosaic_0001>
module attributes {stable_mosaic.version = 11 : i64} {
  func.func @_zs_small_k_kernel(%arg0: i32, %arg1: memref<1x2048xf32, #tpu.memory_space<vmem>>, %arg2: memref<1x2048xf32, #tpu.memory_space<vmem>>) attributes {dimension_semantics = [#tpu.dimension_semantics<parallel>], iteration_bounds = array<i64: 1>, scalar_prefetch = 0 : i64, scratch_operands = 0 : i64, tpu.core_type = #tpu.core_type<tc>, window_params = [{transform_indices = @transform_0, window_bounds = array<i64: 1, 2048>}, {transform_indices = @transform_1, window_bounds = array<i64: 1, 2048>}]} {
    %c0 = arith.constant 0 : index
    %c0_0 = arith.constant 0 : index
    %0 = vector.load %arg1[%c0, %c0_0] : memref<1x2048xf32, #tpu.memory_space<vmem>>, vector<1x2048xf32>
    %1 = math.exp %0 : vector<1x2048xf32>
    %cst = arith.constant 1.000000e+00 : f32
    %2 = vector.broadcast %cst : f32 to vector<1x2048xf32>
    %3 = arith.subf %1, %2 : vector<1x2048xf32>
    %4 = arith.mulf %3, %3 : vector<1x2048xf32>
    %5 = vector.extract_strided_slice %4 {offsets = [0, 0], sizes = [1, 1024], strides = [1, 1]} : vector<1x2048xf32> to vector<1x1024xf32>
    %6 = vector.extract_strided_slice %4 {offsets = [0, 1024], sizes = [1, 1024], strides = [1, 1]} : vector<1x2048xf32> to vector<1x1024xf32>
    %7 = arith.addf %5, %6 : vector<1x1024xf32>
    %cst_1 = arith.constant 9.99999974E-6 : f32
    %8 = vector.broadcast %cst_1 : f32 to vector<1x1024xf32>
    %9 = arith.addf %7, %8 : vector<1x1024xf32>
    %10 = tpu.reciprocal %9 {approx = true} : vector<1x1024xf32> -> vector<1x1024xf32>
    %11 = arith.mulf %9, %10 : vector<1x1024xf32>
    %cst_2 = arith.constant 2.000000e+00 : f32
    %12 = vector.broadcast %cst_2 : f32 to vector<1x1024xf32>
    %13 = arith.subf %12, %11 : vector<1x1024xf32>
    %14 = arith.mulf %10, %13 : vector<1x1024xf32>
    %15 = vector.extract_strided_slice %4 {offsets = [0, 0], sizes = [1, 1024], strides = [1, 1]} : vector<1x2048xf32> to vector<1x1024xf32>
    %16 = arith.mulf %15, %14 : vector<1x1024xf32>
    %c0_3 = arith.constant 0 : index
    %c0_4 = arith.constant 0 : index
    %17 = vector.load %arg2[%c0_3, %c0_4] : memref<1x2048xf32, #tpu.memory_space<vmem>>, vector<1x1024xf32>
    tpu.vector_store %arg2[%c0_3, %c0_4], %16 {strides = array<i32>} : memref<1x2048xf32, #tpu.memory_space<vmem>>, vector<1x1024xf32>,
    %18 = vector.extract_strided_slice %4 {offsets = [0, 1024], sizes = [1, 1024], strides = [1, 1]} : vector<1x2048xf32> to vector<1x1024xf32>
    %19 = arith.mulf %18, %14 : vector<1x1024xf32>
    %c0_5 = arith.constant 0 : index
    %c1024 = arith.constant 1024 : index
    %20 = vector.load %arg2[%c0_5, %c1024] : memref<1x2048xf32, #tpu.memory_space<vmem>>, vector<1x1024xf32>
    tpu.vector_store %arg2[%c0_5, %c1024], %19 {strides = array<i32>} : memref<1x2048xf32, #tpu.memory_space<vmem>>, vector<1x1024xf32>,
    return
  }
  func.func @transform_0(%arg0: i32) -> (i32, i32) {
    %c0_i32 = arith.constant 0 : i32
    %c0_i32_0 = arith.constant 0 : i32
    return %arg0, %c0_i32 : i32, i32
  }
  func.func @transform_1(%arg0: i32) -> (i32, i32) {
    %c0_i32 = arith.constant 0 : i32
    %c0_i32_0 = arith.constant 0 : i32
    return %arg0, %c0_i32 : i32, i32
  }
}

</mosaic_0001>

<llo_original>
// kernel: tpu_custom_call.1
$region0: #{tpu_custom_call.1}
  #allocation0 [shape = 'u32[]', space=smem, size = 0x4, offset = 0x4, fixed_abs, tag = 'smem constant byte address 0x4 - core index']
  #allocation1 [shape = 'u32[144,128]{1,0:T(1,128)}', space=vmem, size = 0x12000, scoped, tag = 'internal scratch']
  %s0 = inlined_call_operand.hbm [shape: f32[1,2048], index: 0, kind: input, shape index: {}]
  %s1 = inlined_call_operand.hbm [shape: f32[1,2048], index: 1, kind: output, shape index: {}]
  %s2 = sld [smem:[#allocation0]]
  $region18: #{tpu_custom_call.1} parent=0
    _
  %s4 = ssub.s32 1, %s2
  %s5 = scalar_select 0, %s4, %s2
  $region1: #{tpu_custom_call.1} parent=0
    #allocation2 [shape = 'u8[8192]{0}', space=vmem, size = 0x2000, scoped, tag = 'input window, operand 0, single buffered']
    #allocation3 [shape = 's32[1]{0}', space=sflag, size = 0x4, scoped, tag = 'scoped memory for tpu_custom_call.1']
    #allocation4 [shape = 's32[1]{0}', space=sflag, size = 0x4, scoped, tag = 'scoped memory for tpu_custom_call.1']
    #allocation5 [shape = 'u8[8192]{0}', space=vmem, size = 0x2000, scoped, tag = 'output window, operand 0, single buffered']
    %6 = vsyncpa [#allocation3], 0
    %7 = vsyncpa [#allocation4], 0
    // Predicated region
    $region2: #{tpu_custom_call.1} parent=1 // pred_check
      _
    $region3: #{tpu_custom_call.1} parent=1 // pred_check_branch
      %9 = sbr.rel (0) target = $region5
    $region4: #{tpu_custom_call.1} parent=1 // pred_region
      %s11 = ssub.s32 256, 256
      %12 = vsyncadd [#allocation3], %s11
      %s14 = sshll.u32 [#allocation2], 4
      %s15 = int_to_ptr.vmem [resolvable:$true] %s14
      %17 = dma.hbm_to_vmem [thread:$0]  %s0, 256, %s15, [#allocation3]
    $region5: #{tpu_custom_call.1} parent=1 // pred_fallthru
      _
    // Predicated region
    $region6: #{tpu_custom_call.1} parent=1 // pred_check
      _
    $region7: #{tpu_custom_call.1} parent=1 // pred_check_branch
      %19 = sbr.rel (0) target = $region9
    $region8: #{tpu_custom_call.1} parent=1 // pred_region
      %20 = dma.done [#allocation3], 256
    $region9: #{tpu_custom_call.1} parent=1 // pred_fallthru
      _
    %v21 = vld [vmem:[#allocation2] sm:$0xff]
    %v22 = vld [vmem:[#allocation2 + $0x8] sm:$0xff]
    %v23 = vmul.f32 %v21, 1.442695
    %v24 = vpow.pop %v23
    %v25 = vmul.f32 %v22, 1.442695
    %v26 = vpow.pop %v25
    %v27 = vsub.f32 %v24, 1.0
    %v28 = vsub.f32 %v26, 1.0
    %v29 = vmul.f32 %v27, %v27
    %v30 = vmul.f32 %v28, %v28
    %v31 = vadd.f32 %v29, %v30
    %v32 = vadd.f32 %v31, 1e-05
    %v33 = vrcp.pop %v32
    %v34 = vmul.f32 %v32, %v33
    %v35 = vsub.f32 2.0, %v34
    %v36 = vmul.f32 %v33, %v35
    %v37 = vmul.f32 %v29, %v36
    %38 = vst [vmem:[#allocation5] sm:$0xff] %v37
    %v39 = vmul.f32 %v30, %v36
    %40 = vst [vmem:[#allocation5 + $0x8] sm:$0xff] %v39
    // Predicated region
    $region10: #{tpu_custom_call.1} parent=1 // pred_check
      _
    $region11: #{tpu_custom_call.1} parent=1 // pred_check_branch
      %42 = sbr.rel (0) target = $region13
    $region12: #{tpu_custom_call.1} parent=1 // pred_region
      %s44 = ssub.s32 256, 256
      %45 = vsyncadd [#allocation4], %s44
      %s47 = sshll.u32 [#allocation5], 4
      %s48 = int_to_ptr.vmem [resolvable:$true] %s47
      %50 = dma.vmem_to_hbm [thread:$0]  %s48, 256, %s1, [#allocation4]
    $region13: #{tpu_custom_call.1} parent=1 // pred_fallthru
      _
    // Predicated region
    $region14: #{tpu_custom_call.1} parent=1 // pred_check
      _
    $region15: #{tpu_custom_call.1} parent=1 // pred_check_branch
      %52 = sbr.rel (0) target = $region17
    $region16: #{tpu_custom_call.1} parent=1 // pred_region
      %53 = dma.done [#allocation4], 256
    $region17: #{tpu_custom_call.1} parent=1 // pred_fallthru
      _
    %54 = vsyncpa [#allocation3], 1
    %55 = vsyncpa [#allocation4], 1

</llo_original>
